<compile_context>
chip_gen: v7x
topology: tpu7x:2x2x1
jax: 0.10.0
libtpu: 0.0.40
codegen_flags: <defaults>
</compile_context>

<pallas_src>
import jax
import jax.numpy as jnp
from jax.experimental import pallas as pl
from jax.experimental.pallas import tpu as pltpu


INPUT_DIM = 4096
OUTPUT_DIM = 1
DEFAULT_BLOCK_BATCH = 512  # rows of x per grid step (sweepable 512-2048)


def _round_up(n, m):
    return ((n + m - 1) // m) * m


def logreg_kernel(x_ref, w_ref, b_ref, o_ref):
    # x_ref: (TB, 4096) VMEM, w_ref: (1, 4096) VMEM, b_ref: (1, 1) SMEM,
    # o_ref: (TB, 1) VMEM.
    x = x_ref[...]                                   # (TB, 4096)
    w = w_ref[...]                                   # (1, 4096), broadcasts
    z = jnp.sum(x * w, axis=-1, keepdims=True)       # VPU mul + XLU reduce
    z = z + b_ref[0, 0]                              # scalar bias from SMEM
    o_ref[...] = jax.nn.sigmoid(z).astype(o_ref.dtype)


def logistic_regression_forward(x, w, b, *, block_batch=DEFAULT_BLOCK_BATCH):
    """Forward pass of LogisticRegression.

    x: (B, 4096) f32
    w: (1, 4096) f32   -- PyTorch nn.Linear weight layout (out_dim, in_dim)
    b: (1,)      f32   -- PyTorch nn.Linear bias
    returns: (B, 1) f32 = sigmoid(x @ w.T + b)
    """
    B, D = x.shape
    assert D == INPUT_DIM
    assert w.shape == (OUTPUT_DIM, INPUT_DIM)

    w = w.reshape(OUTPUT_DIM, INPUT_DIM).astype(jnp.float32)
    b = jnp.asarray(b, jnp.float32).reshape(1, 1)

    # Batch tile: multiple of 8 (sublane), capped by block_batch.
    tb = min(block_batch, _round_up(B, 8))
    b_pad = _round_up(B, tb)
    if b_pad != B:
        x = jnp.pad(x, ((0, b_pad - B), (0, 0)))

    grid = (b_pad // tb,)

    out = pl.pallas_call(
        logreg_kernel,
        out_shape=jax.ShapeDtypeStruct((b_pad, OUTPUT_DIM), jnp.float32),
        grid_spec=pltpu.PrefetchScalarGridSpec(
            num_scalar_prefetch=0,
            grid=grid,
            in_specs=[
                # Streamed, double-buffered x tile.
                pl.BlockSpec((tb, INPUT_DIM), lambda i: (i, 0)),
                # Weight stays resident in VMEM across all grid steps.
                pl.BlockSpec((OUTPUT_DIM, INPUT_DIM), lambda i: (0, 0)),
                # Scalar bias in SMEM.
                pl.BlockSpec(memory_space=pltpu.MemorySpace.SMEM),
            ],
            out_specs=pl.BlockSpec((tb, OUTPUT_DIM), lambda i: (i, 0)),
        ),
        compiler_params=pltpu.CompilerParams(
            # Each grid step writes a distinct output tile -> fully parallel
            # (megacore sharding on v7x; harmless on v5e/v6e).
            dimension_semantics=("parallel",),
            # ~17 MiB needed for a 512-row double-buffered tile + weight/out;
            # raise above v5e's 16 MiB default, well under v7x's 64 MiB VMEM.
            vmem_limit_bytes=32 * 1024 * 1024,
        ),
    )(x, w, b)

    return out[:B]


if __name__ == "__main__":
    key = jax.random.PRNGKey(0)
    kx, kw, kb, kx2 = jax.random.split(key, 4)

    # Deterministic parameter init mirroring torch.nn.Linear's default
    # uniform(-1/sqrt(fan_in), 1/sqrt(fan_in)).
    bound = 1.0 / jnp.sqrt(jnp.float32(INPUT_DIM))
    w = jax.random.uniform(kw, (OUTPUT_DIM, INPUT_DIM), dtype=jnp.float32,
                           minval=-bound, maxval=bound)
    b = jax.random.uniform(kb, (OUTPUT_DIM,), dtype=jnp.float32,
                           minval=-bound, maxval=bound)

    # Case 1: small batch, single grid step.
    batch = 8
    x = jax.random.normal(kx, (batch, INPUT_DIM), dtype=jnp.float32)
    out = jax.block_until_ready(logistic_regression_forward(x, w, b))
    ref = jax.nn.sigmoid(x @ w.T + b)
    assert out.shape == (batch, OUTPUT_DIM)
    assert jnp.allclose(out, ref, atol=1e-5, rtol=1e-5)

    # Case 2: ragged batch with multi-step grid (exercises tiling + padding).
    batch2 = 24
    x2 = jax.random.normal(kx2, (batch2, INPUT_DIM), dtype=jnp.float32)
    out2 = jax.block_until_ready(
        logistic_regression_forward(x2, w, b, block_batch=16))
    ref2 = jax.nn.sigmoid(x2 @ w.T + b)
    assert out2.shape == (batch2, OUTPUT_DIM)
    assert jnp.allclose(out2, ref2, atol=1e-5, rtol=1e-5)

    print("KERNEL_OK")
</pallas_src>

<mosaic_0001>
module attributes {stable_mosaic.version = 11 : i64} {
  func.func @logreg_kernel(%arg0: i32, %arg1: memref<8x4096xf32, #tpu.memory_space<vmem>>, %arg2: memref<1x4096xf32, #tpu.memory_space<vmem>>, %arg3: memref<1x1xf32, #tpu.memory_space<smem>>, %arg4: memref<8x1xf32, #tpu.memory_space<vmem>>) attributes {dimension_semantics = [#tpu.dimension_semantics<parallel>], iteration_bounds = array<i64: 1>, scalar_prefetch = 0 : i64, scratch_operands = 0 : i64, tpu.core_type = #tpu.core_type<tc>, window_params = [{transform_indices = @transform_0, window_bounds = array<i64: 8, 4096>}, {pipeline_mode = #tpu.pipeline_mode<synchronous>, transform_indices = @transform_1, window_bounds = array<i64: 1, 4096>}, {transform_indices = @transform_2, window_bounds = array<i64: 1, 1>}, {transform_indices = @transform_3, window_bounds = array<i64: 8, 1>}]} {
    %c0 = arith.constant 0 : index
    %c0_0 = arith.constant 0 : index
    %0 = vector.load %arg1[%c0, %c0_0] : memref<8x4096xf32, #tpu.memory_space<vmem>>, vector<8x4096xf32>
    %c0_1 = arith.constant 0 : index
    %c0_2 = arith.constant 0 : index
    %1 = vector.load %arg2[%c0_1, %c0_2] : memref<1x4096xf32, #tpu.memory_space<vmem>>, vector<1x4096xf32>
    %2 = vector.broadcast %1 : vector<1x4096xf32> to vector<8x4096xf32>
    %3 = arith.mulf %0, %2 : vector<8x4096xf32>
    %cst = arith.constant dense<0.000000e+00> : vector<8xf32>
    %4 = vector.multi_reduction <add>, %3, %cst [1] : vector<8x4096xf32> to vector<8xf32>
    %5 = vector.shape_cast %4 : vector<8xf32> to vector<8x1xf32>
    %c0_3 = arith.constant 0 : index
    %c0_4 = arith.constant 0 : index
    %6 = memref.load %arg3[%c0_3, %c0_4] : memref<1x1xf32, #tpu.memory_space<smem>>
    %7 = vector.broadcast %6 : f32 to vector<8x1xf32>
    %8 = arith.addf %5, %7 : vector<8x1xf32>
    %9 = arith.negf %8 : vector<8x1xf32>
    %10 = math.exp %9 : vector<8x1xf32>
    %cst_5 = arith.constant 1.000000e+00 : f32
    %11 = vector.broadcast %cst_5 : f32 to vector<8x1xf32>
    %12 = arith.addf %11, %10 : vector<8x1xf32>
    %13 = arith.divf %11, %12 : vector<8x1xf32>
    %c0_6 = arith.constant 0 : index
    %c0_7 = arith.constant 0 : index
    %14 = vector.load %arg4[%c0_6, %c0_7] : memref<8x1xf32, #tpu.memory_space<vmem>>, vector<8x1xf32>
    tpu.vector_store %arg4[%c0_6, %c0_7], %13 {strides = array<i32>} : memref<8x1xf32, #tpu.memory_space<vmem>>, vector<8x1xf32>,
    return
  }
  func.func @transform_0(%arg0: i32) -> (i32, i32) {
    %c0_i32 = arith.constant 0 : i32
    %c0_i32_0 = arith.constant 0 : i32
    return %arg0, %c0_i32 : i32, i32
  }
  func.func @transform_1(%arg0: i32) -> (i32, i32) {
    %c0_i32 = arith.constant 0 : i32
    %c0_i32_0 = arith.constant 0 : i32
    %c0_i32_1 = arith.constant 0 : i32
    return %c0_i32, %c0_i32_0 : i32, i32
  }
  func.func @transform_2(%arg0: i32) -> (i32, i32) {
    %c0_i32 = arith.constant 0 : i32
    %c0_i32_0 = arith.constant 0 : i32
    %c0_i32_1 = arith.constant 0 : i32
    return %c0_i32, %c0_i32_0 : i32, i32
  }
  func.func @transform_3(%arg0: i32) -> (i32, i32) {
    %c0_i32 = arith.constant 0 : i32
    %c0_i32_0 = arith.constant 0 : i32
    return %arg0, %c0_i32 : i32, i32
  }
}

</mosaic_0001>

<llo_original>
// kernel: tpu_custom_call.1
$region0: #{tpu_custom_call.1}
  #allocation0 [shape = 'u32[]', space=smem, size = 0x4, offset = 0x4, fixed_abs, tag = 'smem constant byte address 0x4 - core index']
  #allocation1 [shape = 'u32[144,128]{1,0:T(1,128)}', space=vmem, size = 0x12000, scoped, tag = 'internal scratch']
  #allocation2 [shape = 'f32[1,1]{1,0:T(1,128)S(6)}', space=smem, size = 0x200, scoped, tag = 'scoped memory for tpu_custom_call.1']
  %s0 = inlined_call_operand.hbm [shape: f32[8,4096], index: 0, kind: input, shape index: {}]
  %s1 = inlined_call_operand.hbm [shape: f32[1,4096], index: 1, kind: input, shape index: {}]
  %s2 = inlined_call_operand.<no memory space> [shape: f32[1,1], index: 2, kind: input, shape index: {}]
  %s3 = inlined_call_operand.vmem [shape: f32[8,1], index: 3, kind: output, shape index: {}]
  %s4 = sld [smem:[#allocation0]]
  $region30: #{tpu_custom_call.1} parent=0
    _
  %s6 = ssub.s32 1, %s4
  %s7 = scalar_select 0, %s6, %s4
  %8 = sst [smem:[#allocation2]] %s2
  $region1: #{tpu_custom_call.1} parent=0
    #allocation3 [shape = 'u8[131072]{0}', space=vmem, size = 0x20000, scoped, tag = 'input window, operand 0, single buffered']
    #allocation4 [shape = 's32[1]{0}', space=sflag, size = 0x4, scoped, tag = 'scoped memory for tpu_custom_call.1']
    #allocation5 [shape = 'u8[16384]{0}', space=vmem, size = 0x4000, scoped, tag = 'input window, operand 1, single buffered']
    #allocation6 [shape = 's32[1]{0}', space=sflag, size = 0x4, scoped, tag = 'scoped memory for tpu_custom_call.1']
    %9 = vsyncpa [#allocation4], 0
    %10 = vsyncpa [#allocation6], 0
    // Predicated region
    $region2: #{tpu_custom_call.1} parent=1 // pred_check
      _
    $region3: #{tpu_custom_call.1} parent=1 // pred_check_branch
      %12 = sbr.rel (0) target = $region5
    $region4: #{tpu_custom_call.1} parent=1 // pred_region
      %s14 = ssub.s32 4096, 4096
      %15 = vsyncadd [#allocation4], %s14
      %s17 = sshll.u32 [#allocation3], 4
      %s18 = int_to_ptr.vmem [resolvable:$true] %s17
      %20 = dma.hbm_to_vmem [thread:$0]  %s0, 4096, %s18, [#allocation4]
    $region5: #{tpu_custom_call.1} parent=1 // pred_fallthru
      _
    // Predicated region
    $region6: #{tpu_custom_call.1} parent=1 // pred_check
      _
    $region7: #{tpu_custom_call.1} parent=1 // pred_check_branch
      %22 = sbr.rel (0) target = $region9
    $region8: #{tpu_custom_call.1} parent=1 // pred_region
      %s24 = ssub.s32 512, 512
      %25 = vsyncadd [#allocation6], %s24
      %s27 = sshll.u32 [#allocation5], 4
      %s28 = int_to_ptr.vmem [resolvable:$true] %s27
      %30 = dma.hbm_to_vmem [thread:$0]  %s1, 512, %s28, [#allocation6]
    $region9: #{tpu_custom_call.1} parent=1 // pred_fallthru
      _
    // Predicated region
    $region10: #{tpu_custom_call.1} parent=1 // pred_check
      _
    $region11: #{tpu_custom_call.1} parent=1 // pred_check_branch
      %32 = sbr.rel (0) target = $region13
    $region12: #{tpu_custom_call.1} parent=1 // pred_region
      _
    $region13: #{tpu_custom_call.1} parent=1 // pred_fallthru
      _
    // Predicated region
    $region14: #{tpu_custom_call.1} parent=1 // pred_check
      _
    $region15: #{tpu_custom_call.1} parent=1 // pred_check_branch
      %34 = sbr.rel (0) target = $region17
    $region16: #{tpu_custom_call.1} parent=1 // pred_region
      %35 = dma.done [#allocation4], 4096
    $region17: #{tpu_custom_call.1} parent=1 // pred_fallthru
      _
    // Predicated region
    $region18: #{tpu_custom_call.1} parent=1 // pred_check
      _
    $region19: #{tpu_custom_call.1} parent=1 // pred_check_branch
      %37 = sbr.rel (0) target = $region21
    $region20: #{tpu_custom_call.1} parent=1 // pred_region
      %38 = dma.done [#allocation6], 512
    $region21: #{tpu_custom_call.1} parent=1 // pred_fallthru
      _
    %v39 = vld [vmem:[#allocation3] sm:$0xff]
    %v40 = vld [vmem:[#allocation3 + $0x8] sm:$0xff]
    %v41 = vld [vmem:[#allocation3 + $0x10] sm:$0xff]
    %v42 = vld [vmem:[#allocation3 + $0x18] sm:$0xff]
    %v43 = vld [vmem:[#allocation3 + $0x20] sm:$0xff]
    %v44 = vld [vmem:[#allocation3 + $0x28] sm:$0xff]
    %v45 = vld [vmem:[#allocation3 + $0x30] sm:$0xff]
    %v46 = vld [vmem:[#allocation3 + $0x38] sm:$0xff]
    %v47 = vld [vmem:[#allocation3 + $0x40] sm:$0xff]
    %v48 = vld [vmem:[#allocation3 + $0x48] sm:$0xff]
    %v49 = vld [vmem:[#allocation3 + $0x50] sm:$0xff]
    %v50 = vld [vmem:[#allocation3 + $0x58] sm:$0xff]
    %v51 = vld [vmem:[#allocation3 + $0x60] sm:$0xff]
    %v52 = vld [vmem:[#allocation3 + $0x68] sm:$0xff]
    %v53 = vld [vmem:[#allocation3 + $0x70] sm:$0xff]
    %v54 = vld [vmem:[#allocation3 + $0x78] sm:$0xff]
    %v55 = vld [vmem:[#allocation3 + $0x80] sm:$0xff]
    %v56 = vld [vmem:[#allocation3 + $0x88] sm:$0xff]
    %v57 = vld [vmem:[#allocation3 + $0x90] sm:$0xff]
    %v58 = vld [vmem:[#allocation3 + $0x98] sm:$0xff]
    %v59 = vld [vmem:[#allocation3 + $0xa0] sm:$0xff]
    %v60 = vld [vmem:[#allocation3 + $0xa8] sm:$0xff]
    %v61 = vld [vmem:[#allocation3 + $0xb0] sm:$0xff]
    %v62 = vld [vmem:[#allocation3 + $0xb8] sm:$0xff]
    %v63 = vld [vmem:[#allocation3 + $0xc0] sm:$0xff]
    %v64 = vld [vmem:[#allocation3 + $0xc8] sm:$0xff]
    %v65 = vld [vmem:[#allocation3 + $0xd0] sm:$0xff]
    %v66 = vld [vmem:[#allocation3 + $0xd8] sm:$0xff]
    %v67 = vld [vmem:[#allocation3 + $0xe0] sm:$0xff]
    %v68 = vld [vmem:[#allocation3 + $0xe8] sm:$0xff]
    %v69 = vld [vmem:[#allocation3 + $0xf0] sm:$0xff]
    %v70 = vld [vmem:[#allocation3 + $0xf8] sm:$0xff]
    %v71 = vld [vmem:[#allocation5] sm:$0xff]
    %v72 = vld [vmem:[#allocation5 + $0x8] sm:$0xff]
    %v73 = vld [vmem:[#allocation5 + $0x10] sm:$0xff]
    %v74 = vld [vmem:[#allocation5 + $0x18] sm:$0xff]
    %v79 = vlaneseq
    %v80 = vshrl.u32 %v79, 7
    %v81 = vsub.s32 0, %v80
    %v82 = vrot.slane %v71, %v81
    %v83 = vlaneseq
    %v84 = vshrl.u32 %v83, 7
    %v85 = vsub.s32 1, %v84
    %v86 = vrot.slane %v71, %v85
    %v87 = vlaneseq
    %v88 = vshrl.u32 %v87, 7
    %v89 = vsub.s32 2, %v88
    %v90 = vrot.slane %v71, %v89
    %v91 = vlaneseq
    %v92 = vshrl.u32 %v91, 7
    %v93 = vsub.s32 3, %v92
    %v94 = vrot.slane %v71, %v93
    %v95 = vlaneseq
    %v96 = vshrl.u32 %v95, 7
    %v97 = vsub.s32 4, %v96
    %v98 = vrot.slane %v71, %v97
    %v99 = vlaneseq
    %v100 = vshrl.u32 %v99, 7
    %v101 = vsub.s32 5, %v100
    %v102 = vrot.slane %v71, %v101
    %v103 = vlaneseq
    %v104 = vshrl.u32 %v103, 7
    %v105 = vsub.s32 6, %v104
    %v106 = vrot.slane %v71, %v105
    %v107 = vlaneseq
    %v108 = vshrl.u32 %v107, 7
    %v109 = vsub.s32 7, %v108
    %v110 = vrot.slane %v71, %v109
    %v111 = vlaneseq
    %v112 = vshrl.u32 %v111, 7
    %v113 = vsub.s32 0, %v112
    %v114 = vrot.slane %v72, %v113
    %v115 = vlaneseq
    %v116 = vshrl.u32 %v115, 7
    %v117 = vsub.s32 1, %v116
    %v118 = vrot.slane %v72, %v117
    %v119 = vlaneseq
    %v120 = vshrl.u32 %v119, 7
    %v121 = vsub.s32 2, %v120
    %v122 = vrot.slane %v72, %v121
    %v123 = vlaneseq
    %v124 = vshrl.u32 %v123, 7
    %v125 = vsub.s32 3, %v124
    %v126 = vrot.slane %v72, %v125
    %v127 = vlaneseq
    %v128 = vshrl.u32 %v127, 7
    %v129 = vsub.s32 4, %v128
    %v130 = vrot.slane %v72, %v129
    %v131 = vlaneseq
    %v132 = vshrl.u32 %v131, 7
    %v133 = vsub.s32 5, %v132
    %v134 = vrot.slane %v72, %v133
    %v135 = vlaneseq
    %v136 = vshrl.u32 %v135, 7
    %v137 = vsub.s32 6, %v136
    %v138 = vrot.slane %v72, %v137
    %v139 = vlaneseq
    %v140 = vshrl.u32 %v139, 7
    %v141 = vsub.s32 7, %v140
    %v142 = vrot.slane %v72, %v141
    %v143 = vlaneseq
    %v144 = vshrl.u32 %v143, 7
    %v145 = vsub.s32 0, %v144
    %v146 = vrot.slane %v73, %v145
    %v147 = vlaneseq
    %v148 = vshrl.u32 %v147, 7
    %v149 = vsub.s32 1, %v148
    %v150 = vrot.slane %v73, %v149
    %v151 = vlaneseq
    %v152 = vshrl.u32 %v151, 7
    %v153 = vsub.s32 2, %v152
    %v154 = vrot.slane %v73, %v153
    %v155 = vlaneseq
    %v156 = vshrl.u32 %v155, 7
    %v157 = vsub.s32 3, %v156
    %v158 = vrot.slane %v73, %v157
    %v159 = vlaneseq
    %v160 = vshrl.u32 %v159, 7
    %v161 = vsub.s32 4, %v160
    %v162 = vrot.slane %v73, %v161
    %v163 = vlaneseq
    %v164 = vshrl.u32 %v163, 7
    %v165 = vsub.s32 5, %v164
    %v166 = vrot.slane %v73, %v165
    %v167 = vlaneseq
    %v168 = vshrl.u32 %v167, 7
    %v169 = vsub.s32 6, %v168
    %v170 = vrot.slane %v73, %v169
    %v171 = vlaneseq
    %v172 = vshrl.u32 %v171, 7
    %v173 = vsub.s32 7, %v172
    %v174 = vrot.slane %v73, %v173
    %v175 = vlaneseq
    %v176 = vshrl.u32 %v175, 7
    %v177 = vsub.s32 0, %v176
    %v178 = vrot.slane %v74, %v177
    %v179 = vlaneseq
    %v180 = vshrl.u32 %v179, 7
    %v181 = vsub.s32 1, %v180
    %v182 = vrot.slane %v74, %v181
    %v183 = vlaneseq
    %v184 = vshrl.u32 %v183, 7
    %v185 = vsub.s32 2, %v184
    %v186 = vrot.slane %v74, %v185
    %v187 = vlaneseq
    %v188 = vshrl.u32 %v187, 7
    %v189 = vsub.s32 3, %v188
    %v190 = vrot.slane %v74, %v189
    %v191 = vlaneseq
    %v192 = vshrl.u32 %v191, 7
    %v193 = vsub.s32 4, %v192
    %v194 = vrot.slane %v74, %v193
    %v195 = vlaneseq
    %v196 = vshrl.u32 %v195, 7
    %v197 = vsub.s32 5, %v196
    %v198 = vrot.slane %v74, %v197
    %v199 = vlaneseq
    %v200 = vshrl.u32 %v199, 7
    %v201 = vsub.s32 6, %v200
    %v202 = vrot.slane %v74, %v201
    %v203 = vlaneseq
    %v204 = vshrl.u32 %v203, 7
    %v205 = vsub.s32 7, %v204
    %v206 = vrot.slane %v74, %v205
    %v239 = vmul.f32 %v39, %v82
    %v240 = vmul.f32 %v40, %v86
    %v241 = vmul.f32 %v41, %v90
    %v242 = vmul.f32 %v42, %v94
    %v243 = vmul.f32 %v43, %v98
    %v244 = vmul.f32 %v44, %v102
    %v245 = vmul.f32 %v45, %v106
    %v246 = vmul.f32 %v46, %v110
    %v247 = vmul.f32 %v47, %v114
    %v248 = vmul.f32 %v48, %v118
    %v249 = vmul.f32 %v49, %v122
    %v250 = vmul.f32 %v50, %v126
    %v251 = vmul.f32 %v51, %v130
    %v252 = vmul.f32 %v52, %v134
    %v253 = vmul.f32 %v53, %v138
    %v254 = vmul.f32 %v54, %v142
    %v255 = vmul.f32 %v55, %v146
    %v256 = vmul.f32 %v56, %v150
    %v257 = vmul.f32 %v57, %v154
    %v258 = vmul.f32 %v58, %v158
    %v259 = vmul.f32 %v59, %v162
    %v260 = vmul.f32 %v60, %v166
    %v261 = vmul.f32 %v61, %v170
    %v262 = vmul.f32 %v62, %v174
    %v263 = vmul.f32 %v63, %v178
    %v264 = vmul.f32 %v64, %v182
    %v265 = vmul.f32 %v65, %v186
    %v266 = vmul.f32 %v66, %v190
    %v267 = vmul.f32 %v67, %v194
    %v268 = vmul.f32 %v68, %v198
    %v269 = vmul.f32 %v69, %v202
    %v270 = vmul.f32 %v70, %v206
    %v271 = vadd.f32 %v239, %v240
    %v272 = vadd.f32 %v271, %v241
    %v273 = vadd.f32 %v272, %v242
    %v274 = vadd.f32 %v273, %v243
    %v275 = vadd.f32 %v274, %v244
    %v276 = vadd.f32 %v275, %v245
    %v277 = vadd.f32 %v276, %v246
    %v278 = vadd.f32 %v277, %v247
    %v279 = vadd.f32 %v278, %v248
    %v280 = vadd.f32 %v279, %v249
    %v281 = vadd.f32 %v280, %v250
    %v282 = vadd.f32 %v281, %v251
    %v283 = vadd.f32 %v282, %v252
    %v284 = vadd.f32 %v283, %v253
    %v285 = vadd.f32 %v284, %v254
    %v286 = vadd.f32 %v285, %v255
    %v287 = vadd.f32 %v286, %v256
    %v288 = vadd.f32 %v287, %v257
    %v289 = vadd.f32 %v288, %v258
    %v290 = vadd.f32 %v289, %v259
    %v291 = vadd.f32 %v290, %v260
    %v292 = vadd.f32 %v291, %v261
    %v293 = vadd.f32 %v292, %v262
    %v294 = vadd.f32 %v293, %v263
    %v295 = vadd.f32 %v294, %v264
    %v296 = vadd.f32 %v295, %v265
    %v297 = vadd.f32 %v296, %v266
    %v298 = vadd.f32 %v297, %v267
    %v299 = vadd.f32 %v298, %v268
    %v300 = vadd.f32 %v299, %v269
    %v301 = vadd.f32 %v300, %v270
    %302 = vadd.xlane.f32.xlu0 %v301
    %v303 = vpop.xlane.xlu0 %302
    %s304 = sld [smem:[#allocation2]]
    %v305 = vstv %s304
    %v306 = vadd.f32 %v303, %v305
    %v307 = vxor.u32 %v306, 2147483648
    %v308 = vmul.f32 %v307, 1.442695
    %v309 = vpow.pop %v308
    %v310 = vadd.f32 %v309, 1.0
    %v311 = vrcp.pop %v310
    %v312 = vmul.f32 1.0, %v311
    %vm313 = vcmask 7168
    %314 = vst.msk [vmem:[%s3] sm:$0xff] %vm313, %v312
    // Predicated region
    $region22: #{tpu_custom_call.1} parent=1 // pred_check
      _
    $region23: #{tpu_custom_call.1} parent=1 // pred_check_branch
      %316 = sbr.rel (0) target = $region25
    $region24: #{tpu_custom_call.1} parent=1 // pred_region
      _
    $region25: #{tpu_custom_call.1} parent=1 // pred_fallthru
      _
    // Predicated region
    $region26: #{tpu_custom_call.1} parent=1 // pred_check
      _
    $region27: #{tpu_custom_call.1} parent=1 // pred_check_branch
      %318 = sbr.rel (0) target = $region29
    $region28: #{tpu_custom_call.1} parent=1 // pred_region
      _
    $region29: #{tpu_custom_call.1} parent=1 // pred_fallthru
      _
    %319 = vsyncpa [#allocation4], 1
    %320 = vsyncpa [#allocation6], 1

</llo_original>
